<compile_context>
chip_gen: v5e
topology: v5e:2x2
jax: 0.10.0
libtpu: 0.0.40
codegen_flags: <defaults>
</compile_context>

<pallas_src>
import functools

import jax
import jax.numpy as jnp
import numpy as np
from jax import lax
from jax.experimental import pallas as pl
from jax.experimental.pallas import tpu as pltpu

_LANES = 128
_N_STATS = 6  # sum_p, sum_t, sum_p2, sum_t2, sum_pt, sum_sqdiff


def _cdiv(a, b):
    return -(-a // b)


def _num_tensorcores():
    """TensorCores per JAX device: megacore (v4/v5p) and v7x -> 2, v5e/v6e -> 1."""
    try:
        kind = jax.devices()[0].device_kind.lower()
    except Exception:
        return 1
    if ("v5p" in kind) or ("v4" in kind) or ("v7" in kind) or ("7x" in kind):
        return 2
    return 1


# ---------------------------------------------------------------------------
# Kernel: streaming lane-wise moment accumulation (one vreg per statistic).
# ---------------------------------------------------------------------------
def _moment_kernel(pred_ref, targ_ref, out_ref, acc_ref, *, valid_rows, mask_rows):
    k = pl.program_id(1)

    @pl.when(k == 0)
    def _init():
        acc_ref[...] = jnp.zeros_like(acc_ref)

    p = pred_ref[...].astype(jnp.float32)          # (sb_blk, 128), bf16 widened here
    t = targ_ref[...].astype(jnp.float32)
    sb, ln = p.shape

    if mask_rows:
        # Only the final logical block can be partial (or a fully-out-of-range
        # duplicate introduced by the clamped index_map); zero its extra rows.
        blk = pl.program_id(0) * pl.num_programs(1) + k
        row = blk * sb + lax.broadcasted_iota(jnp.int32, (sb, ln), 0)
        keep = row < valid_rows
        p = jnp.where(keep, p, 0.0)
        t = jnp.where(keep, t, 0.0)

    d = p - t

    def _vreg_sum(x):
        # (sb_blk, 128) -> (8, 128): sum whole vregs (sublane-group tree reduce),
        # so only one accumulator vreg per statistic is read/written per step.
        return jnp.sum(x.reshape(sb // 8, 8, ln), axis=0)

    acc_ref[0] += _vreg_sum(p)
    acc_ref[1] += _vreg_sum(t)
    acc_ref[2] += _vreg_sum(p * p)
    acc_ref[3] += _vreg_sum(t * t)
    acc_ref[4] += _vreg_sum(p * t)
    acc_ref[5] += _vreg_sum(d * d)      # kept explicit: avoids cancellation when p ~= t

    @pl.when(k == pl.num_programs(1) - 1)
    def _epilogue():
        # Single stacked sublane reduce -> lane-dense (1, 6, 128) store.
        out_ref[...] = jnp.sum(acc_ref[...], axis=1)[None]


# ---------------------------------------------------------------------------
# Tiny scalar helpers (wrapper side, negligible work).
# ---------------------------------------------------------------------------
def _pair_stats(p, t):
    d = p - t
    return jnp.stack([jnp.sum(p), jnp.sum(t), jnp.sum(p * p),
                      jnp.sum(t * t), jnp.sum(p * t), jnp.sum(d * d)])


def _ccc_from_stats(s, n):
    mp = s[0] / n
    mt = s[1] / n
    vp = s[2] / n - mp * mp            # biased variance (torch.var(unbiased=False))
    vt = s[3] / n - mt * mt
    cov = s[4] / n - mp * mt
    return 2.0 * cov / (vp + vt + (mp - mt) ** 2)


# ---------------------------------------------------------------------------
# Small-batch fused-jnp fallback (Pallas launch overhead not worth it).
# ---------------------------------------------------------------------------
def _jnp_fused_loss(p, t, mse_weight, ccc_weight):
    p = jnp.asarray(p, jnp.float32)
    t = jnp.asarray(t, jnp.float32)
    diff = p - t
    mse = jnp.mean(diff * diff)
    if ccc_weight <= 0.0:
        return mse

    def _ccc(a, b):
        am, bm = jnp.mean(a), jnp.mean(b)
        av = jnp.mean((a - am) ** 2)
        bv = jnp.mean((b - bm) ** 2)
        cov = jnp.mean((a - am) * (b - bm))
        return 2.0 * cov / (av + bv + (am - bm) ** 2)

    avg = 0.5 * (_ccc(p[:, 0], t[:, 0]) + _ccc(p[:, 1], t[:, 1]))
    return mse_weight * mse + ccc_weight * (1.0 - avg)


# ---------------------------------------------------------------------------
# Public wrapper = MSE_CCC_Loss.forward
# ---------------------------------------------------------------------------
def mse_ccc_loss(predictions, targets, *, mse_weight=1.0, ccc_weight=0.0,
                 use_pallas=None, block_sublanes=1024):
    """JAX/Pallas equivalent of MSE_CCC_Loss.forward. Returns a scalar f32."""
    # Glue: the PyTorch module unwraps (pred, aux) tuples.
    if isinstance(predictions, tuple) and len(predictions) == 2:
        predictions = predictions[0]

    def _as_supported(x):
        x = jnp.asarray(x)
        if x.dtype not in (jnp.float32, jnp.bfloat16):
            x = x.astype(jnp.float32)
        return x                        # keep bf16 as bf16: no HBM upcast copy

    predictions = _as_supported(predictions)
    targets = _as_supported(targets)
    assert predictions.shape == targets.shape and predictions.ndim == 2
    B, C = predictions.shape
    if ccc_weight > 0.0:
        assert C == 2, "CCC branch indexes columns 0 and 1 (valence, arousal)"

    flat_len = B * C
    R = flat_len // _LANES              # full lane-dense rows
    rem = flat_len % _LANES             # trailing elements (< 128), wrapper-reduced

    if use_pallas is None:
        # Below ~64K elements, launch + per-step overhead beats any DMA win.
        use_pallas = flat_len >= (1 << 16)
    if (not use_pallas) or R < 16:
        return _jnp_fused_loss(predictions, targets, float(mse_weight), float(ccc_weight))

    # --- lane-dense 2-D view of the flat stream (no full-array pad) ---
    if rem == 0:
        p2 = predictions.reshape(R, _LANES)          # free row-major reshape
        t2 = targets.reshape(R, _LANES)
        p_tail = t_tail = None
    else:
        # TODO(synk): this prefix slice may materialize a copy of the bulk in
        # XLA; the path is fully zero-copy only when flat_len % 128 == 0.
        p_flat = predictions.reshape(-1)
        t_flat = targets.reshape(-1)
        main_len = R * _LANES
        p2 = p_flat[:main_len].reshape(R, _LANES)
        t2 = t_flat[:main_len].reshape(R, _LANES)
        p_tail = p_flat[main_len:]
        t_tail = t_flat[main_len:]

    # --- tiling / TensorCore split ---
    block_sublanes = max(16, (int(block_sublanes) // 16) * 16)   # bf16-safe tile
    sb_blk = min(block_sublanes, (R // 16) * 16)
    n_blocks = _cdiv(R, sb_blk)
    num_tc = _num_tensorcores()
    n_par = num_tc if (num_tc > 1 and n_blocks >= num_tc) else 1
    n_inner = _cdiv(n_blocks, n_par)
    # Row masking only needed for a partial / duplicated last block.
    mask_rows = (R % sb_blk != 0) or (n_par * n_inner != n_blocks)

    last_blk = n_blocks - 1
    if n_par * n_inner == n_blocks:
        def in_map(p, k):
            return (p * n_inner + k, 0)
    else:
        def in_map(p, k):                            # clamp; kernel masks the dup
            return (jnp.minimum(p * n_inner + k, last_blk), 0)

    kernel = functools.partial(_moment_kernel, valid_rows=R, mask_rows=mask_rows)
    partials = pl.pallas_call(
        kernel,
        out_shape=jax.ShapeDtypeStruct((n_par, _N_STATS, _LANES), jnp.float32),
        grid=(n_par, n_inner),
        in_specs=[pl.BlockSpec((sb_blk, _LANES), in_map),
                  pl.BlockSpec((sb_blk, _LANES), in_map)],
        out_specs=pl.BlockSpec((1, _N_STATS, _LANES), lambda p, k: (p, 0, 0)),
        scratch_shapes=[pltpu.VMEM((_N_STATS, 8, _LANES), jnp.float32)],
        compiler_params=pltpu.CompilerParams(
            dimension_semantics=("parallel", "arbitrary")),
    )(p2, t2)

    lane_tot = jnp.sum(partials, axis=0)             # combine per-core partials: (6, 128)

    # --- scalar epilogue (a handful of floats) ---
    tail = None
    if p_tail is not None:
        tail = (p_tail.astype(jnp.float32), t_tail.astype(jnp.float32))

    sq_total = jnp.sum(lane_tot[5])
    if tail is not None:
        sq_total = sq_total + jnp.sum((tail[0] - tail[1]) ** 2)
    mse = sq_total / jnp.float32(flat_len)
    if ccc_weight <= 0.0:
        # Module returns the plain (unweighted) MSE when ccc_weight <= 0.
        return mse

    # Row-major flatten of (B, 2): flat index parity == column index.
    col0 = jnp.sum(lane_tot[:, 0::2], axis=1)        # (6,) valence stats
    col1 = jnp.sum(lane_tot[:, 1::2], axis=1)        # (6,) arousal stats
    if tail is not None:
        col0 = col0 + _pair_stats(tail[0][0::2], tail[1][0::2])
        col1 = col1 + _pair_stats(tail[0][1::2], tail[1][1::2])

    n = jnp.float32(B)
    avg_ccc = 0.5 * (_ccc_from_stats(col0, n) + _ccc_from_stats(col1, n))
    return jnp.float32(mse_weight) * mse + jnp.float32(ccc_weight) * (1.0 - avg_ccc)


# ---------------------------------------------------------------------------
# Pure-numpy (float64) reference reproducing the PyTorch semantics.
# ---------------------------------------------------------------------------
def _reference_loss(pred, targ, mse_weight, ccc_weight):
    pred = np.asarray(pred, np.float64)
    targ = np.asarray(targ, np.float64)
    mse = np.mean((pred - targ) ** 2)
    if ccc_weight <= 0.0:
        return mse

    def ccc(a, b):
        am, bm = a.mean(), b.mean()
        av, bv = a.var(), b.var()  # biased
        cov = np.mean((a - am) * (b - bm))
        return 2.0 * cov / (av + bv + (am - bm) ** 2)

    v = ccc(pred[:, 0], targ[:, 0])
    a = ccc(pred[:, 1], targ[:, 1])
    return mse_weight * mse + ccc_weight * (1.0 - 0.5 * (v + a))


if __name__ == "__main__":
    # MSE_CCC_Loss has no learnable tensors; its only "parameters" are weights.
    mse_weight, ccc_weight = 1.0, 0.5

    key = jax.random.PRNGKey(0)
    kp, kt, kp2, kt2 = jax.random.split(key, 4)

    C = 2
    # Lane-aligned batch (2*B % 128 == 0): fully zero-copy Pallas path.
    B = 4096
    pred = jax.random.normal(kp, (B, C), dtype=jnp.float32)
    targ = 0.8 * pred + 0.3 * jax.random.normal(kt, (B, C), dtype=jnp.float32)

    # Non-aligned batch: exercises the in-kernel row mask + wrapper tail reduce.
    B2 = 4360                                   # flat 8720 -> rem=16, R=68 (68 % 16 != 0)
    pred2 = jax.random.normal(kp2, (B2, C), dtype=jnp.float32)
    targ2 = 0.8 * pred2 + 0.3 * jax.random.normal(kt2, (B2, C), dtype=jnp.float32)

    run = lambda fn, *a: jax.block_until_ready(jax.jit(fn)(*a))

    # Pallas path, CCC enabled; block_sublanes=16 -> multi-block grid exercising
    # init / accumulate / epilogue.
    f_ccc = functools.partial(mse_ccc_loss, mse_weight=mse_weight,
                              ccc_weight=ccc_weight, use_pallas=True,
                              block_sublanes=16)
    loss_ccc = run(f_ccc, pred, targ)

    # Pallas path, MSE-only (default module config ccc_weight=0.0).
    f_mse = functools.partial(mse_ccc_loss, mse_weight=1.0, ccc_weight=0.0,
                              use_pallas=True, block_sublanes=16)
    loss_mse = run(f_mse, pred, targ)

    # Pallas path, non-lane-aligned batch (partial last block + tail elements).
    loss_ccc2 = run(f_ccc, pred2, targ2)

    # Pallas path, bf16 inputs streamed without a wrapper-side f32 upcast.
    pred_bf, targ_bf = pred.astype(jnp.bfloat16), targ.astype(jnp.bfloat16)
    loss_bf = run(f_ccc, pred_bf, targ_bf)

    # Small-batch auto-dispatch path (bypasses Pallas per the perf review).
    f_auto = functools.partial(mse_ccc_loss, mse_weight=mse_weight,
                               ccc_weight=ccc_weight)
    loss_small = run(f_auto, pred[:8], targ[:8])

    p_np, t_np = np.asarray(pred), np.asarray(targ)
    p2_np, t2_np = np.asarray(pred2), np.asarray(targ2)
    pbf_np = np.asarray(pred_bf.astype(jnp.float32))
    tbf_np = np.asarray(targ_bf.astype(jnp.float32))

    np.testing.assert_allclose(np.float64(loss_ccc),
                               _reference_loss(p_np, t_np, mse_weight, ccc_weight),
                               rtol=1e-4, atol=1e-4)
    np.testing.assert_allclose(np.float64(loss_mse),
                               _reference_loss(p_np, t_np, 1.0, 0.0),
                               rtol=1e-4, atol=1e-4)
    np.testing.assert_allclose(np.float64(loss_ccc2),
                               _reference_loss(p2_np, t2_np, mse_weight, ccc_weight),
                               rtol=1e-4, atol=1e-4)
    np.testing.assert_allclose(np.float64(loss_bf),
                               _reference_loss(pbf_np, tbf_np, mse_weight, ccc_weight),
                               rtol=2e-3, atol=2e-3)
    np.testing.assert_allclose(np.float64(loss_small),
                               _reference_loss(p_np[:8], t_np[:8], mse_weight, ccc_weight),
                               rtol=1e-4, atol=1e-4)

    print("KERNEL_OK")
</pallas_src>

<mosaic_0001>
module attributes {stable_mosaic.version = 11 : i64} {
  func.func @_moment_kernel(%arg0: i32, %arg1: i32, %arg2: memref<16x128xf32, #tpu.memory_space<vmem>>, %arg3: memref<16x128xf32, #tpu.memory_space<vmem>>, %arg4: memref<1x6x128xf32, #tpu.memory_space<vmem>>, %arg5: memref<6x8x128xf32, #tpu.memory_space<vmem>>) attributes {dimension_semantics = [#tpu.dimension_semantics<parallel>, #tpu.dimension_semantics<arbitrary>], iteration_bounds = array<i64: 1, 4>, scalar_prefetch = 0 : i64, scratch_operands = 1 : i64, tpu.core_type = #tpu.core_type<tc>, window_params = [{transform_indices = @transform_0, window_bounds = array<i64: 16, 128>}, {transform_indices = @transform_1, window_bounds = array<i64: 16, 128>}, {transform_indices = @transform_2, window_bounds = array<i64: 1, 6, 128>}]} {
    %c0_i32 = arith.constant 0 : i32
    %0 = arith.cmpi eq, %arg1, %c0_i32 : i32
    %1 = arith.extui %0 : i1 to i32
    %c0_i32_0 = arith.constant 0 : i32
    %2 = arith.cmpi ne, %1, %c0_i32_0 : i32
    scf.if %2 {
      %cst_41 = arith.constant 0.000000e+00 : f32
      %61 = vector.broadcast %cst_41 : f32 to vector<6x8x128xf32>
      %c0_42 = arith.constant 0 : index
      %c0_43 = arith.constant 0 : index
      %c0_44 = arith.constant 0 : index
      %62 = vector.load %arg5[%c0_42, %c0_43, %c0_44] : memref<6x8x128xf32, #tpu.memory_space<vmem>>, vector<6x8x128xf32>
      tpu.vector_store %arg5[%c0_42, %c0_43, %c0_44], %61 {strides = array<i32>} : memref<6x8x128xf32, #tpu.memory_space<vmem>>, vector<6x8x128xf32>,
    } else {
    }
    %c0 = arith.constant 0 : index
    %c0_1 = arith.constant 0 : index
    %3 = vector.load %arg2[%c0, %c0_1] : memref<16x128xf32, #tpu.memory_space<vmem>>, vector<16x128xf32>
    %c0_2 = arith.constant 0 : index
    %c0_3 = arith.constant 0 : index
    %4 = vector.load %arg3[%c0_2, %c0_3] : memref<16x128xf32, #tpu.memory_space<vmem>>, vector<16x128xf32>
    %5 = arith.subf %3, %4 : vector<16x128xf32>
    %c0_4 = arith.constant 0 : index
    %c0_5 = arith.constant 0 : index
    %c0_6 = arith.constant 0 : index
    %6 = vector.load %arg5[%c0_4, %c0_5, %c0_6] : memref<6x8x128xf32, #tpu.memory_space<vmem>>, vector<1x8x128xf32>
    %7 = vector.shape_cast %6 : vector<1x8x128xf32> to vector<8x128xf32>
    %8 = vector.shape_cast %3 : vector<16x128xf32> to vector<2x8x128xf32>
    %cst = arith.constant dense<0.000000e+00> : vector<8x128xf32>
    %9 = vector.multi_reduction <add>, %8, %cst [0] : vector<2x8x128xf32> to vector<8x128xf32>
    %10 = arith.addf %7, %9 : vector<8x128xf32>
    %c0_7 = arith.constant 0 : index
    %c0_8 = arith.constant 0 : index
    %c0_9 = arith.constant 0 : index
    %11 = vector.load %arg5[%c0_7, %c0_8, %c0_9] : memref<6x8x128xf32, #tpu.memory_space<vmem>>, vector<1x8x128xf32>
    %12 = vector.shape_cast %11 : vector<1x8x128xf32> to vector<8x128xf32>
    %13 = vector.shape_cast %10 : vector<8x128xf32> to vector<1x8x128xf32>
    tpu.vector_store %arg5[%c0_7, %c0_8, %c0_9], %13 {strides = array<i32>} : memref<6x8x128xf32, #tpu.memory_space<vmem>>, vector<1x8x128xf32>,
    %c1 = arith.constant 1 : index
    %c0_10 = arith.constant 0 : index
    %c0_11 = arith.constant 0 : index
    %14 = vector.load %arg5[%c1, %c0_10, %c0_11] : memref<6x8x128xf32, #tpu.memory_space<vmem>>, vector<1x8x128xf32>
    %15 = vector.shape_cast %14 : vector<1x8x128xf32> to vector<8x128xf32>
    %16 = vector.shape_cast %4 : vector<16x128xf32> to vector<2x8x128xf32>
    %cst_12 = arith.constant dense<0.000000e+00> : vector<8x128xf32>
    %17 = vector.multi_reduction <add>, %16, %cst_12 [0] : vector<2x8x128xf32> to vector<8x128xf32>
    %18 = arith.addf %15, %17 : vector<8x128xf32>
    %c1_13 = arith.constant 1 : index
    %c0_14 = arith.constant 0 : index
    %c0_15 = arith.constant 0 : index
    %19 = vector.load %arg5[%c1_13, %c0_14, %c0_15] : memref<6x8x128xf32, #tpu.memory_space<vmem>>, vector<1x8x128xf32>
    %20 = vector.shape_cast %19 : vector<1x8x128xf32> to vector<8x128xf32>
    %21 = vector.shape_cast %18 : vector<8x128xf32> to vector<1x8x128xf32>
    tpu.vector_store %arg5[%c1_13, %c0_14, %c0_15], %21 {strides = array<i32>} : memref<6x8x128xf32, #tpu.memory_space<vmem>>, vector<1x8x128xf32>,
    %c2 = arith.constant 2 : index
    %c0_16 = arith.constant 0 : index
    %c0_17 = arith.constant 0 : index
    %22 = vector.load %arg5[%c2, %c0_16, %c0_17] : memref<6x8x128xf32, #tpu.memory_space<vmem>>, vector<1x8x128xf32>
    %23 = vector.shape_cast %22 : vector<1x8x128xf32> to vector<8x128xf32>
    %24 = arith.mulf %3, %3 : vector<16x128xf32>
    %25 = vector.shape_cast %24 : vector<16x128xf32> to vector<2x8x128xf32>
    %cst_18 = arith.constant dense<0.000000e+00> : vector<8x128xf32>
    %26 = vector.multi_reduction <add>, %25, %cst_18 [0] : vector<2x8x128xf32> to vector<8x128xf32>
    %27 = arith.addf %23, %26 : vector<8x128xf32>
    %c2_19 = arith.constant 2 : index
    %c0_20 = arith.constant 0 : index
    %c0_21 = arith.constant 0 : index
    %28 = vector.load %arg5[%c2_19, %c0_20, %c0_21] : memref<6x8x128xf32, #tpu.memory_space<vmem>>, vector<1x8x128xf32>
    %29 = vector.shape_cast %28 : vector<1x8x128xf32> to vector<8x128xf32>
    %30 = vector.shape_cast %27 : vector<8x128xf32> to vector<1x8x128xf32>
    tpu.vector_store %arg5[%c2_19, %c0_20, %c0_21], %30 {strides = array<i32>} : memref<6x8x128xf32, #tpu.memory_space<vmem>>, vector<1x8x128xf32>,
    %c3 = arith.constant 3 : index
    %c0_22 = arith.constant 0 : index
    %c0_23 = arith.constant 0 : index
    %31 = vector.load %arg5[%c3, %c0_22, %c0_23] : memref<6x8x128xf32, #tpu.memory_space<vmem>>, vector<1x8x128xf32>
    %32 = vector.shape_cast %31 : vector<1x8x128xf32> to vector<8x128xf32>
    %33 = arith.mulf %4, %4 : vector<16x128xf32>
    %34 = vector.shape_cast %33 : vector<16x128xf32> to vector<2x8x128xf32>
    %cst_24 = arith.constant dense<0.000000e+00> : vector<8x128xf32>
    %35 = vector.multi_reduction <add>, %34, %cst_24 [0] : vector<2x8x128xf32> to vector<8x128xf32>
    %36 = arith.addf %32, %35 : vector<8x128xf32>
    %c3_25 = arith.constant 3 : index
    %c0_26 = arith.constant 0 : index
    %c0_27 = arith.constant 0 : index
    %37 = vector.load %arg5[%c3_25, %c0_26, %c0_27] : memref<6x8x128xf32, #tpu.memory_space<vmem>>, vector<1x8x128xf32>
    %38 = vector.shape_cast %37 : vector<1x8x128xf32> to vector<8x128xf32>
    %39 = vector.shape_cast %36 : vector<8x128xf32> to vector<1x8x128xf32>
    tpu.vector_store %arg5[%c3_25, %c0_26, %c0_27], %39 {strides = array<i32>} : memref<6x8x128xf32, #tpu.memory_space<vmem>>, vector<1x8x128xf32>,
    %c4 = arith.constant 4 : index
    %c0_28 = arith.constant 0 : index
    %c0_29 = arith.constant 0 : index
    %40 = vector.load %arg5[%c4, %c0_28, %c0_29] : memref<6x8x128xf32, #tpu.memory_space<vmem>>, vector<1x8x128xf32>
    %41 = vector.shape_cast %40 : vector<1x8x128xf32> to vector<8x128xf32>
    %42 = arith.mulf %3, %4 : vector<16x128xf32>
    %43 = vector.shape_cast %42 : vector<16x128xf32> to vector<2x8x128xf32>
    %cst_30 = arith.constant dense<0.000000e+00> : vector<8x128xf32>
    %44 = vector.multi_reduction <add>, %43, %cst_30 [0] : vector<2x8x128xf32> to vector<8x128xf32>
    %45 = arith.addf %41, %44 : vector<8x128xf32>
    %c4_31 = arith.constant 4 : index
    %c0_32 = arith.constant 0 : index
    %c0_33 = arith.constant 0 : index
    %46 = vector.load %arg5[%c4_31, %c0_32, %c0_33] : memref<6x8x128xf32, #tpu.memory_space<vmem>>, vector<1x8x128xf32>
    %47 = vector.shape_cast %46 : vector<1x8x128xf32> to vector<8x128xf32>
    %48 = vector.shape_cast %45 : vector<8x128xf32> to vector<1x8x128xf32>
    tpu.vector_store %arg5[%c4_31, %c0_32, %c0_33], %48 {strides = array<i32>} : memref<6x8x128xf32, #tpu.memory_space<vmem>>, vector<1x8x128xf32>,
    %c5 = arith.constant 5 : index
    %c0_34 = arith.constant 0 : index
    %c0_35 = arith.constant 0 : index
    %49 = vector.load %arg5[%c5, %c0_34, %c0_35] : memref<6x8x128xf32, #tpu.memory_space<vmem>>, vector<1x8x128xf32>
    %50 = vector.shape_cast %49 : vector<1x8x128xf32> to vector<8x128xf32>
    %51 = arith.mulf %5, %5 : vector<16x128xf32>
    %52 = vector.shape_cast %51 : vector<16x128xf32> to vector<2x8x128xf32>
    %cst_36 = arith.constant dense<0.000000e+00> : vector<8x128xf32>
    %53 = vector.multi_reduction <add>, %52, %cst_36 [0] : vector<2x8x128xf32> to vector<8x128xf32>
    %54 = arith.addf %50, %53 : vector<8x128xf32>
    %c5_37 = arith.constant 5 : index
    %c0_38 = arith.constant 0 : index
    %c0_39 = arith.constant 0 : index
    %55 = vector.load %arg5[%c5_37, %c0_38, %c0_39] : memref<6x8x128xf32, #tpu.memory_space<vmem>>, vector<1x8x128xf32>
    %56 = vector.shape_cast %55 : vector<1x8x128xf32> to vector<8x128xf32>
    %57 = vector.shape_cast %54 : vector<8x128xf32> to vector<1x8x128xf32>
    tpu.vector_store %arg5[%c5_37, %c0_38, %c0_39], %57 {strides = array<i32>} : memref<6x8x128xf32, #tpu.memory_space<vmem>>, vector<1x8x128xf32>,
    %c3_i32 = arith.constant 3 : i32
    %58 = arith.cmpi eq, %arg1, %c3_i32 : i32
    %59 = arith.extui %58 : i1 to i32
    %c0_i32_40 = arith.constant 0 : i32
    %60 = arith.cmpi ne, %59, %c0_i32_40 : i32
    scf.if %60 {
      %c0_41 = arith.constant 0 : index
      %c0_42 = arith.constant 0 : index
      %c0_43 = arith.constant 0 : index
      %61 = vector.load %arg5[%c0_41, %c0_42, %c0_43] : memref<6x8x128xf32, #tpu.memory_space<vmem>>, vector<6x8x128xf32>
      %cst_44 = arith.constant dense<0.000000e+00> : vector<6x128xf32>
      %62 = vector.multi_reduction <add>, %61, %cst_44 [1] : vector<6x8x128xf32> to vector<6x128xf32>
      %63 = vector.shape_cast %62 : vector<6x128xf32> to vector<1x6x128xf32>
      %c0_45 = arith.constant 0 : index
      %c0_46 = arith.constant 0 : index
      %c0_47 = arith.constant 0 : index
      %64 = vector.load %arg4[%c0_45, %c0_46, %c0_47] : memref<1x6x128xf32, #tpu.memory_space<vmem>>, vector<1x6x128xf32>
      tpu.vector_store %arg4[%c0_45, %c0_46, %c0_47], %63 {strides = array<i32>} : memref<1x6x128xf32, #tpu.memory_space<vmem>>, vector<1x6x128xf32>,
    } else {
    }
    return
  }
  func.func @transform_0(%arg0: i32, %arg1: i32) -> (i32, i32) {
    %c4_i32 = arith.constant 4 : i32
    %0 = arith.muli %arg0, %c4_i32 : i32
    %1 = arith.addi %0, %arg1 : i32
    %c0_i32 = arith.constant 0 : i32
    %c0_i32_0 = arith.constant 0 : i32
    return %1, %c0_i32 : i32, i32
  }
  func.func @transform_1(%arg0: i32, %arg1: i32) -> (i32, i32) {
    %c4_i32 = arith.constant 4 : i32
    %0 = arith.muli %arg0, %c4_i32 : i32
    %1 = arith.addi %0, %arg1 : i32
    %c0_i32 = arith.constant 0 : i32
    %c0_i32_0 = arith.constant 0 : i32
    return %1, %c0_i32 : i32, i32
  }
  func.func @transform_2(%arg0: i32, %arg1: i32) -> (i32, i32, i32) {
    %c0_i32 = arith.constant 0 : i32
    %c0_i32_0 = arith.constant 0 : i32
    %c0_i32_1 = arith.constant 0 : i32
    return %arg0, %c0_i32, %c0_i32_0 : i32, i32, i32
  }
}

</mosaic_0001>

<llo_original>
// kernel: mse_ccc_loss.1
$region0: #{mse_ccc_loss.1}
  #allocation0 [shape = 'u32[]', space=smem, size = 0x4, offset = 0x4, fixed_abs, tag = 'smem constant byte address 0x4 - core index']
  #allocation1 [shape = 'u32[72,128]{1,0:T(1,128)}', space=vmem, size = 0x9000, scoped, tag = 'internal scratch']
  #allocation2 [shape = 'f32[6,8,128]{2,1,0:T(8,128)}', space=vmem, size = 0x6000, scoped, tag = 'scratch operand']
  %s0 = inlined_call_operand.vmem [shape: f32[64,128], index: 0, kind: input, shape index: {}]
  %s1 = inlined_call_operand.vmem [shape: f32[64,128], index: 1, kind: input, shape index: {}]
  %s2 = inlined_call_operand.vmem [shape: f32[1,6,128], index: 2, kind: output, shape index: {}]
  %s3 = sld [smem:[#allocation0]]
  $region49: #{mse_ccc_loss.1} parent=0
    _
  %s5 = ssub.s32 1, %s3
  %s6 = scalar_select 0, %s5, %s3
  loop: start=0, step=1, limit=6
  $region2: #{mse_ccc_loss.1} parent=0 // loop_pre_header
    _
  $region3: #{mse_ccc_loss.1} parent=0 // loop_header
    %s8 = sphi 0, %s12
    %p9 = scmp.ge.s32.totalorder %s8, 6
    %s15 = sphi 0, %s27
    %s16 = sphi 0, %s23
    %s17 = sphi 0, %s15
    %s18 = sphi 0, %s16
    %s19 = sphi 0, %s17
    %s20 = sphi 0, %s18
    %s34 = sphi 0, %s36
    %s37 = sphi 0, %s34
    %s38 = sphi 0, %s37
    %s54 = sphi 0, %s38
    %s64 = sphi 0, %s66
    %s67 = sphi 0, %s64
    %s68 = sphi 0, %s67
    %s84 = sphi 0, %s68
    %s90 = sphi 0, %s92
    %s93 = sphi 0, %s90
    %s94 = sphi 0, %s93
    %s110 = sphi 0, %s94
  $region4: #{mse_ccc_loss.1} parent=0 // loop_header_branch
    %11 = sbr.rel (%p9) target = $region8
  $region5: #{mse_ccc_loss.1} parent=0 // loop_body
    %s13 = ssub.s32 %s8, 1
    %s14 = ssub.s32 %s8, 2
    %s21 = sadd.s32 1, %s16
    %p22 = scmp.ge.s32.totalorder %s21, 4
    %s23 = scalar_select %p22, 0, %s21
    %s24 = sadd.s32 1, %s15
    %s25 = scalar_select %p22, %s24, %s15
    %p26 = scmp.ge.s32.totalorder %s25, 1
    %s27 = scalar_select %p26, 0, %s25
    %s28 = smul.u32 %s15, 4
    %s29 = sadd.s32 %s28, %s16
    %s30 = smul.u32 %s27, 4
    %s31 = sadd.s32 %s30, %s23
    %s32 = ssub.s32 %s29, %s31
    %p33 = scmp.eq.s32.totalorder %s32, 0
    %s35 = sadd.s32 %s34, 1
    %s36 = scalar_select %p33, %s34, %s35
    %p39 = pneg %p33
    %p40 = scmp.eq.s32.totalorder %s8, 3
    %p41 = por %p39, %p40
    %p42 = scmp.ne.s32.totalorder %s34, %s37
    %p43 = scmp.eq.s32.totalorder %s8, 0
    %p44 = por %p42, %p43
    %p45 = scmp.ne.s32.totalorder %s34, %s37
    %p46 = scmp.eq.s32.totalorder %s13, 3
    %p47 = por %p45, %p46
    %p48 = scmp.ne.s32.totalorder %s37, %s38
    %p49 = scmp.eq.s32.totalorder %s13, 0
    %p50 = por %p48, %p49
    %p51 = scmp.ne.s32.totalorder %s37, %s38
    %p52 = scmp.eq.s32.totalorder %s14, 3
    %p53 = por %p51, %p52
    %p55 = scmp.ne.s32.totalorder %s38, %s54
    %p56 = scmp.eq.s32.totalorder %s14, 0
    %p57 = por %p55, %p56
    %s58 = smul.u32 %s15, 4
    %s59 = sadd.s32 %s58, %s16
    %s60 = smul.u32 %s27, 4
    %s61 = sadd.s32 %s60, %s23
    %s62 = ssub.s32 %s59, %s61
    %p63 = scmp.eq.s32.totalorder %s62, 0
    %s65 = sadd.s32 %s64, 1
    %s66 = scalar_select %p63, %s64, %s65
    %p69 = pneg %p63
    %p70 = scmp.eq.s32.totalorder %s8, 3
    %p71 = por %p69, %p70
    %p72 = scmp.ne.s32.totalorder %s64, %s67
    %p73 = scmp.eq.s32.totalorder %s8, 0
    %p74 = por %p72, %p73
    %p75 = scmp.ne.s32.totalorder %s64, %s67
    %p76 = scmp.eq.s32.totalorder %s13, 3
    %p77 = por %p75, %p76
    %p78 = scmp.ne.s32.totalorder %s67, %s68
    %p79 = scmp.eq.s32.totalorder %s13, 0
    %p80 = por %p78, %p79
    %p81 = scmp.ne.s32.totalorder %s67, %s68
    %p82 = scmp.eq.s32.totalorder %s14, 3
    %p83 = por %p81, %p82
    %p85 = scmp.ne.s32.totalorder %s68, %s84
    %p86 = scmp.eq.s32.totalorder %s14, 0
    %p87 = por %p85, %p86
    %s88 = ssub.s32 %s15, %s27
    %p89 = scmp.eq.s32.totalorder %s88, 0
    %s91 = sadd.s32 %s90, 1
    %s92 = scalar_select %p89, %s90, %s91
    %p95 = pneg %p89
    %p96 = scmp.eq.s32.totalorder %s8, 3
    %p97 = por %p95, %p96
    %p98 = scmp.ne.s32.totalorder %s90, %s93
    %p99 = scmp.eq.s32.totalorder %s8, 0
    %p100 = por %p98, %p99
    %p101 = scmp.ne.s32.totalorder %s90, %s93
    %p102 = scmp.eq.s32.totalorder %s13, 3
    %p103 = por %p101, %p102
    %p104 = scmp.ne.s32.totalorder %s93, %s94
    %p105 = scmp.eq.s32.totalorder %s13, 0
    %p106 = por %p104, %p105
    %p107 = scmp.ne.s32.totalorder %s93, %s94
    %p108 = scmp.eq.s32.totalorder %s14, 3
    %p109 = por %p107, %p108
    %p111 = scmp.ne.s32.totalorder %s94, %s110
    %p112 = scmp.eq.s32.totalorder %s14, 0
    %p113 = por %p111, %p112
    %p114 = scmp.le.s32.totalorder 1, %s8
    %p115 = scmp.lt.s32.totalorder %s8, 5
    %p116 = pnand %p114, %p115
    %p117 = pneg %p116
    // Predicated region
    $region9: #{mse_ccc_loss.1} parent=5 // pred_check
      _
    $region10: #{mse_ccc_loss.1} parent=5 // pred_check_branch
      %119 = sbr.rel (%p116) target = $region12
    $region11: #{mse_ccc_loss.1} parent=5 // pred_region
      %s120 = ssub.s32 %s8, 1
    $region12: #{mse_ccc_loss.1} parent=5 // pred_fallthru
      _
    %p121 = scmp.lt.s32.totalorder %s8, 4
    // Predicated region
    $region13: #{mse_ccc_loss.1} parent=5 // pred_check
      %p122 = pneg %p121
    $region14: #{mse_ccc_loss.1} parent=5 // pred_check_branch
      %124 = sbr.rel (%p122) target = $region16
    $region15: #{mse_ccc_loss.1} parent=5 // pred_region
      // Predicated region
      $region17: #{mse_ccc_loss.1} parent=15 // pred_check
        %p125 = pneg %p44
      $region18: #{mse_ccc_loss.1} parent=15 // pred_check_branch
        %127 = sbr.rel (%p125) target = $region20
      $region19: #{mse_ccc_loss.1} parent=15 // pred_region
        %s128 = smul.u32 %s15, 4
        %s129 = sadd.s32 %s128, %s16
        %s130 = smul.u32 2, %s129
        %p131 = scmp.lt.s32.totalorder %s130, 7
        %s132 = scalar_select %p131, %s130, 7
        %s133 = smul.addr %s132, 8
        %s134 = scalar_lea.vmem %s0, %s133
        %s135 = smul.u32 %s15, 4
        %s136 = sadd.s32 %s135, %s16
        %s137 = smul.u32 2, %s136
      $region20: #{mse_ccc_loss.1} parent=15 // pred_fallthru
        _
      // Predicated region
      $region21: #{mse_ccc_loss.1} parent=15 // pred_check
        %p138 = pneg %p74
      $region22: #{mse_ccc_loss.1} parent=15 // pred_check_branch
        %140 = sbr.rel (%p138) target = $region24
      $region23: #{mse_ccc_loss.1} parent=15 // pred_region
        %s141 = smul.u32 %s15, 4
        %s142 = sadd.s32 %s141, %s16
        %s143 = smul.u32 2, %s142
        %p144 = scmp.lt.s32.totalorder %s143, 7
        %s145 = scalar_select %p144, %s143, 7
        %s146 = smul.addr %s145, 8
        %s147 = scalar_lea.vmem %s1, %s146
        %s148 = smul.u32 %s15, 4
        %s149 = sadd.s32 %s148, %s16
        %s150 = smul.u32 2, %s149
      $region24: #{mse_ccc_loss.1} parent=15 // pred_fallthru
        _
    $region16: #{mse_ccc_loss.1} parent=5 // pred_fallthru
      _
    %p151 = scmp.le.s32.totalorder 1, %s8
    %p152 = scmp.lt.s32.totalorder %s8, 5
    %p153 = pnand %p151, %p152
    %p154 = pneg %p153
    // Predicated region
    $region25: #{mse_ccc_loss.1} parent=5 // pred_check
      _
    $region26: #{mse_ccc_loss.1} parent=5 // pred_check_branch
      %156 = sbr.rel (%p153) target = $region28
    $region27: #{mse_ccc_loss.1} parent=5 // pred_region
      %s157 = ssub.s32 %s8, 1
      %s158 = smul.u32 %s17, 4
      %s159 = sadd.s32 %s158, %s18
      %s160 = smul.u32 2, %s159
      %p161 = scmp.lt.s32.totalorder %s160, 7
      %s162 = scalar_select %p161, %s160, 7
      %s163 = smul.addr %s162, 8
      %s164 = scalar_lea.vmem %s0, %s163
      %p165 = pneg %p50
      %p166 = pneg %p47
      %s167 = smul.u32 %s17, 4
      %s168 = sadd.s32 %s167, %s18
      %s169 = smul.u32 2, %s168
      %p170 = scmp.lt.s32.totalorder %s169, 7
      %s171 = scalar_select %p170, %s169, 7
      %s172 = smul.addr %s171, 8
      %s173 = scalar_lea.vmem %s1, %s172
      %p174 = pneg %p80
      %p175 = pneg %p77
      %p176 = pneg %p106
      %p177 = pneg %p103
      %p178 = scmp.lt.s32.totalorder %s17, 0
      %s179 = scalar_select %p178, %s17, 0
      %s180 = smul.addr %s179, 8
      %s181 = scalar_lea.vmem %s2, %s180
      %s182 = smul.u32 %s17, 4
      %s183 = sadd.s32 %s182, %s18
      %s184 = smul.u32 2, %s183
      %p185 = scmp.lt.s32.totalorder %s184, 7
      %s186 = scalar_select %p185, %s184, 7
      %s187 = smul.addr %s186, 8
      %s188 = scalar_lea.vmem %s0, %s187
      %s189 = smul.u32 %s17, 4
      %s190 = sadd.s32 %s189, %s18
      %s191 = smul.u32 2, %s190
      %s192 = smul.u32 %s17, 4
      %s193 = sadd.s32 %s192, %s18
      %s194 = smul.u32 2, %s193
      %p195 = scmp.lt.s32.totalorder %s194, 7
      %s196 = scalar_select %p195, %s194, 7
      %s197 = smul.addr %s196, 8
      %s198 = scalar_lea.vmem %s1, %s197
      %s199 = smul.u32 %s17, 4
      %s200 = sadd.s32 %s199, %s18
      %s201 = smul.u32 2, %s200
      %p202 = scmp.lt.s32.totalorder %s17, 0
      %s203 = scalar_select %p202, %s17, 0
      %s204 = smul.addr %s203, 8
      %s205 = scalar_lea.vmem %s2, %s204
      %p206 = scmp.eq.s32.totalorder %s18, 0
      // Predicated region
      $region29: #{mse_ccc_loss.1} parent=27 // pred_check
        %p207 = pneg %p206
      $region30: #{mse_ccc_loss.1} parent=27 // pred_check_branch
        %209 = sbr.rel (%p207) target = $region32
      $region31: #{mse_ccc_loss.1} parent=27 // pred_region
        %210 = vst [vmem:[#allocation2] sm:$0xff] 0.0
        %211 = vst [vmem:[#allocation2 + $0x8] sm:$0xff] 0.0
        %212 = vst [vmem:[#allocation2 + $0x10] sm:$0xff] 0.0
        %213 = vst [vmem:[#allocation2 + $0x18] sm:$0xff] 0.0
        %214 = vst [vmem:[#allocation2 + $0x20] sm:$0xff] 0.0
        %215 = vst [vmem:[#allocation2 + $0x28] sm:$0xff] 0.0
      $region32: #{mse_ccc_loss.1} parent=27 // pred_fallthru
        _
      %v216 = vld [vmem:[%s188] sm:$0xff]
      %v217 = vld [vmem:[%s188 + $0x8] sm:$0xff]
      %v218 = vld [vmem:[%s198] sm:$0xff]
      %v219 = vld [vmem:[%s198 + $0x8] sm:$0xff]
      %v220 = vsub.f32 %v216, %v218
      %v221 = vsub.f32 %v217, %v219
      %v222 = vld [vmem:[#allocation2] sm:$0xff]
      %v223 = vadd.f32 %v216, %v217
      %v224 = vadd.f32 %v222, %v223
      %225 = vst [vmem:[#allocation2] sm:$0xff] %v224
      %s226 = scalar_lea.vmem [#allocation2], 8
      %v227 = vld [vmem:[%s226] sm:$0xff]
      %v228 = vadd.f32 %v218, %v219
      %v229 = vadd.f32 %v227, %v228
      %230 = vst [vmem:[%s226] sm:$0xff] %v229
      %s231 = scalar_lea.vmem [#allocation2], 16
      %v232 = vld [vmem:[%s231] sm:$0xff]
      %v233 = vmul.f32 %v216, %v216
      %v234 = vmul.f32 %v217, %v217
      %v235 = vadd.f32 %v233, %v234
      %v236 = vadd.f32 %v232, %v235
      %237 = vst [vmem:[%s231] sm:$0xff] %v236
      %s238 = scalar_lea.vmem [#allocation2], 24
      %v239 = vld [vmem:[%s238] sm:$0xff]
      %v240 = vmul.f32 %v218, %v218
      %v241 = vmul.f32 %v219, %v219
      %v242 = vadd.f32 %v240, %v241
      %v243 = vadd.f32 %v239, %v242
      %244 = vst [vmem:[%s238] sm:$0xff] %v243
      %s245 = scalar_lea.vmem [#allocation2], 32
      %v246 = vld [vmem:[%s245] sm:$0xff]
      %v247 = vmul.f32 %v216, %v218
      %v248 = vmul.f32 %v217, %v219
      %v249 = vadd.f32 %v247, %v248
      %v250 = vadd.f32 %v246, %v249
      %251 = vst [vmem:[%s245] sm:$0xff] %v250
      %s252 = scalar_lea.vmem [#allocation2], 40
      %v253 = vld [vmem:[%s252] sm:$0xff]
      %v254 = vmul.f32 %v220, %v220
      %v255 = vmul.f32 %v221, %v221
      %v256 = vadd.f32 %v254, %v255
      %v257 = vadd.f32 %v253, %v256
      %258 = vst [vmem:[%s252] sm:$0xff] %v257
      %p259 = scmp.eq.s32.totalorder %s18, 3
      // Predicated region
      $region33: #{mse_ccc_loss.1} parent=27 // pred_check
        %p260 = pneg %p259
      $region34: #{mse_ccc_loss.1} parent=27 // pred_check_branch
        %262 = sbr.rel (%p260) target = $region36
      $region35: #{mse_ccc_loss.1} parent=27 // pred_region
        %v263 = vld [vmem:[#allocation2] sm:$0xff]
        %v264 = vld [vmem:[#allocation2 + $0x8] sm:$0xff]
        %v265 = vld [vmem:[#allocation2 + $0x10] sm:$0xff]
        %v266 = vld [vmem:[#allocation2 + $0x18] sm:$0xff]
        %v267 = vld [vmem:[#allocation2 + $0x20] sm:$0xff]
        %v268 = vld [vmem:[#allocation2 + $0x28] sm:$0xff]
        %v269 = vrot.slane %v263, 4
        %v270 = vadd.f32 %v263, %v269
        %v271 = vrot.slane %v270, 2
        %v272 = vadd.f32 %v270, %v271
        %v273 = vrot.slane %v272, 1
        %v274 = vadd.f32 %v272, %v273
        %v275 = vrot.slane %v264, 4
        %v276 = vadd.f32 %v264, %v275
        %v277 = vrot.slane %v276, 2
        %v278 = vadd.f32 %v276, %v277
        %v279 = vrot.slane %v278, 1
        %v280 = vadd.f32 %v278, %v279
        %v281 = vrot.slane %v265, 4
        %v282 = vadd.f32 %v265, %v281
        %v283 = vrot.slane %v282, 2
        %v284 = vadd.f32 %v282, %v283
        %v285 = vrot.slane %v284, 1
        %v286 = vadd.f32 %v284, %v285
        %v287 = vrot.slane %v266, 4
        %v288 = vadd.f32 %v266, %v287
        %v289 = vrot.slane %v288, 2
        %v290 = vadd.f32 %v288, %v289
        %v291 = vrot.slane %v290, 1
        %v292 = vadd.f32 %v290, %v291
        %v293 = vrot.slane %v267, 4
        %v294 = vadd.f32 %v267, %v293
        %v295 = vrot.slane %v294, 2
        %v296 = vadd.f32 %v294, %v295
        %v297 = vrot.slane %v296, 1
        %v298 = vadd.f32 %v296, %v297
        %v299 = vrot.slane %v268, 4
        %v300 = vadd.f32 %v268, %v299
        %v301 = vrot.slane %v300, 2
        %v302 = vadd.f32 %v300, %v301
        %v303 = vrot.slane %v302, 1
        %v304 = vadd.f32 %v302, %v303
        %vm311 = vcmask 1041409
        %v312 = vsel %vm311, %v280, %v274
        %vm313 = vcmask 1042434
        %v314 = vsel %vm313, %v286, %v312
        %vm315 = vcmask 1043459
        %v316 = vsel %vm315, %v292, %v314
        %vm317 = vcmask 1044484
        %v318 = vsel %vm317, %v298, %v316
        %vm319 = vcmask 1045509
        %v320 = vsel %vm319, %v304, %v318
        %322 = vst [vmem:[%s205] sm:$0x3f] %v320
      $region36: #{mse_ccc_loss.1} parent=27 // pred_fallthru
        _
      %p323 = scmp.lt.s32.totalorder %s17, 0
      %s324 = scalar_select %p323, %s17, 0
      %s325 = smul.addr %s324, 8
      %s326 = scalar_lea.vmem %s2, %s325
      // Predicated region
      $region37: #{mse_ccc_loss.1} parent=27 // pred_check
        %p327 = pneg %p103
      $region38: #{mse_ccc_loss.1} parent=27 // pred_check_branch
        %329 = sbr.rel (%p327) target = $region40
      $region39: #{mse_ccc_loss.1} parent=27 // pred_region
        _
      $region40: #{mse_ccc_loss.1} parent=27 // pred_fallthru
        _
      // Predicated region
      $region41: #{mse_ccc_loss.1} parent=27 // pred_check
        %p330 = pneg %p103
      $region42: #{mse_ccc_loss.1} parent=27 // pred_check_branch
        %332 = sbr.rel (%p330) target = $region44
      $region43: #{mse_ccc_loss.1} parent=27 // pred_region
        %p333 = scmp.lt.s32.totalorder %s17, 0
        %s334 = scalar_select %p333, %s17, 0
        %s335 = smul.addr %s334, 8
        %s336 = scalar_lea.vmem %s2, %s335
      $region44: #{mse_ccc_loss.1} parent=27 // pred_fallthru
        _
    $region28: #{mse_ccc_loss.1} parent=5 // pred_fallthru
      _
    %p337 = scmp.le.s32.totalorder 2, %s8
    // Predicated region
    $region45: #{mse_ccc_loss.1} parent=5 // pred_check
      %p338 = pneg %p337
    $region46: #{mse_ccc_loss.1} parent=5 // pred_check_branch
      %340 = sbr.rel (%p338) target = $region48
    $region47: #{mse_ccc_loss.1} parent=5 // pred_region
      %s341 = ssub.s32 %s8, 2
    $region48: #{mse_ccc_loss.1} parent=5 // pred_fallthru
      _
  $region6: #{mse_ccc_loss.1} parent=0 // loop_footer
    %s12 = sadd.s32 1, %s8
  $region7: #{mse_ccc_loss.1} parent=0 // loop_footer_branch
    %7 = sbr.rel target = $region3
  $region8: #{mse_ccc_loss.1} parent=0 // loop_exit
    _

</llo_original>
